<compile_context>
chip_gen: v6e
topology: v6e:2x2x1
jax: 0.10.0
libtpu: 0.0.40
codegen_flags: <defaults>
</compile_context>

<pallas_src>
import math
import jax
import jax.numpy as jnp
from jax import lax
from jax.experimental import pallas as pl
from jax.experimental.pallas import tpu as pltpu

_INV_SQRT2 = 1.0 / math.sqrt(2.0)
_MAX_COLS = 8192


def _relu_kernel(x_ref, o_ref):
    # Stays in the input dtype — no hidden f32 upcast (bf16 VPU path on v6e/v7x).
    o_ref[...] = jnp.maximum(x_ref[...], 0)


def _gelu_kernel(x_ref, o_ref):
    # Exact erf-based gelu (matches torch.erf form): x * 0.5 * (1 + erf(x/sqrt(2))).
    # TODO(synk): on v7x the f32 erf polynomial can make this VALU-bound; a
    # tanh-approximate gelu (EUP slot) would recover the HBM roofline if the
    # caller tolerates the approximation — kept exact to preserve module semantics.
    x = x_ref[...].astype(jnp.float32)
    y = x * 0.5 * (1.0 + lax.erf(x * _INV_SQRT2))
    o_ref[...] = y.astype(o_ref.dtype)


def _vmem_capacity_bytes():
    try:
        return int(pltpu.get_tpu_info().vmem_capacity_bytes)
    except Exception:
        return 64 << 20  # conservative fallback (v7x per-TC VMEM)


def _default_block_bytes():
    # ~VMEM/8 per block: 2 in-bufs + 2 out-bufs (double buffered) ~= VMEM/2 live.
    # -> 8 MiB on v7x (64 MiB VMEM), 16 MiB on v5e/v6e (128 MiB VMEM).
    vmem = _vmem_capacity_bytes()
    return max(4 << 20, min(16 << 20, vmem // 8))


def _lane_util(c):
    return c / (128.0 * math.ceil(c / 128.0))


def _choose_cols(n_elems, feat):
    """Divisor of n_elems (<= _MAX_COLS) maximizing lane utilization of the last dim."""
    candidates = set()
    i = 1
    while i * i <= n_elems:
        if n_elems % i == 0:
            if i <= _MAX_COLS:
                candidates.add(i)
            j = n_elems // i
            if j <= _MAX_COLS:
                candidates.add(j)
        i += 1
    if feat >= 1 and n_elems % feat == 0:
        candidates.add(feat)  # keep the model's feature dim as a candidate regardless
    # Prefer highest lane utilization, tie-break on wider cols (fewer, bigger rows).
    return max(candidates, key=lambda c: (_lane_util(c), c))


def _choose_layout(n_elems, feat, itemsize, target_block_bytes):
    """Lane-dense (rows, cols) slab layout plus a VMEM-budgeted row tile."""
    cols = _choose_cols(n_elems, feat)
    rows = n_elems // cols

    # Sublane packing: 8 for f32, 16 for bf16/f16, 32 for int8/fp8.
    packing = max(8, 32 // itemsize)
    budget_rows = max(1, target_block_bytes // max(cols * itemsize, 1))
    tm = min(rows, budget_rows)
    if rows > packing:
        # Guarantee >= 2 grid steps so dimension_semantics=("parallel",) can shard
        # the row loop across both v7x TensorCores, and avoid a lone full block +
        # tiny partial block split.
        half = max(packing, (rows // 2 // packing) * packing)
        tm = min(tm, half)
        tm = max(packing, (tm // packing) * packing)  # sublane-aligned row tile
    else:
        tm = rows  # tiny input: block dim == full array dim (always legal)
    return rows, cols, tm


def activate_fun(x, kind: str, *, target_block_bytes=None, donate_input=False):
    """Pallas implementation of ActivateFun.forward ('relu' or 'gelu').

    Note: donate_input only helps if the caller actually donates x at the jit
    boundary; otherwise XLA inserts a copy and the alias is a silent no-op.
    TODO(synk): the largest structural win in a real graph is fusing this
    activation into the producing matmul's epilogue instead of a 2N-byte pass.
    """
    if kind == "relu":
        kernel = _relu_kernel
        flops_per_elem, transc_per_elem = 1, 0
    elif kind == "gelu":
        kernel = _gelu_kernel
        flops_per_elem, transc_per_elem = 5, 1
    else:
        # TODO(synk): the PyTorch module silently returns None for other strings; we raise.
        raise ValueError(f"unsupported activate_fun: {kind}")

    orig_shape = x.shape
    n = x.size
    if n == 0:
        return x
    if target_block_bytes is None:
        target_block_bytes = _default_block_bytes()

    feat = orig_shape[-1] if x.ndim >= 1 else 1
    itemsize = jnp.dtype(x.dtype).itemsize
    rows, cols, tm = _choose_layout(n, feat, itemsize, target_block_bytes)

    x2d = x.reshape(rows, cols)  # contiguous flatten -> no extra HBM copy

    block_bytes = tm * cols * itemsize
    vmem_cap = _vmem_capacity_bytes()
    # Live VMEM ~= 4 * block (double-buffered in + out); leave headroom under physical.
    vmem_limit = int(max(32 << 20, min(vmem_cap - (8 << 20), 4 * block_bytes + (16 << 20))))

    cost = pl.CostEstimate(
        flops=flops_per_elem * n,
        transcendentals=transc_per_elem * n,
        bytes_accessed=2 * n * itemsize,
    )

    out = pl.pallas_call(
        kernel,
        out_shape=jax.ShapeDtypeStruct((rows, cols), x.dtype),
        grid_spec=pltpu.PrefetchScalarGridSpec(
            num_scalar_prefetch=0,
            grid=(pl.cdiv(rows, tm),),          # partial last block: masked stores
            in_specs=[pl.BlockSpec((tm, cols), lambda i: (i, 0))],
            out_specs=pl.BlockSpec((tm, cols), lambda i: (i, 0)),
        ),
        compiler_params=pltpu.CompilerParams(
            dimension_semantics=("parallel",),   # megacore-shardable on v7x
            vmem_limit_bytes=vmem_limit,
        ),
        cost_estimate=cost,
        input_output_aliases={0: 0} if donate_input else {},
    )(x2d)

    return out.reshape(orig_shape)


def _reference(x, kind):
    if kind == "relu":
        return jnp.maximum(x, 0).astype(x.dtype)
    xf = x.astype(jnp.float32)
    return (xf * 0.5 * (1.0 + lax.erf(xf * _INV_SQRT2))).astype(x.dtype)


if __name__ == "__main__":
    key = jax.random.PRNGKey(0)
    k1, k2, k3, k4, k5 = jax.random.split(key, 5)

    test_cases = [
        # (array, tolerance, target_block_bytes override or None)
        (jax.random.normal(k1, (2, 8, 128), dtype=jnp.float32), 1e-5, None),   # lane-dense path
        (jax.random.normal(k2, (4, 7, 96), dtype=jnp.float32), 1e-5, None),    # 128-divisible via divisor search
        (jax.random.normal(k3, (3, 5, 50), dtype=jnp.float32), 1e-5, None),    # non-128-divisible fallback
        (jax.random.normal(k4, (2, 8, 128), dtype=jnp.float32).astype(jnp.bfloat16), 2e-2, None),
        # tiny block budget to exercise the multi-step grid + partial masked last block
        (jax.random.normal(k5, (8, 48, 256), dtype=jnp.float32), 1e-5, 64 << 10),
    ]

    ok = True
    for x, tol, blk in test_cases:
        for kind in ("relu", "gelu"):
            if blk is None:
                y = activate_fun(x, kind)
            else:
                y = activate_fun(x, kind, target_block_bytes=blk)
            jax.block_until_ready(y)
            y_ref = _reference(x, kind)
            err = float(jnp.max(jnp.abs(y.astype(jnp.float32) - y_ref.astype(jnp.float32))))
            if err > tol or y.shape != x.shape or y.dtype != x.dtype:
                ok = False
                print(f"MISMATCH {kind} shape={x.shape} dtype={x.dtype}: max abs err {err}")

    if ok:
        print("KERNEL_OK")
</pallas_src>

<mosaic_0001>
module attributes {stable_mosaic.version = 11 : i64} {
  func.func @_relu_kernel(%arg0: i32, %arg1: memref<1x2048xf32, #tpu.memory_space<vmem>>, %arg2: memref<1x2048xf32, #tpu.memory_space<vmem>>) attributes {dimension_semantics = [#tpu.dimension_semantics<parallel>], iteration_bounds = array<i64: 1>, scalar_prefetch = 0 : i64, scratch_operands = 0 : i64, tpu.core_type = #tpu.core_type<tc>, window_params = [{transform_indices = @transform_0, window_bounds = array<i64: 1, 2048>}, {transform_indices = @transform_1, window_bounds = array<i64: 1, 2048>}]} {
    %c0 = arith.constant 0 : index
    %c0_0 = arith.constant 0 : index
    %0 = vector.load %arg1[%c0, %c0_0] : memref<1x2048xf32, #tpu.memory_space<vmem>>, vector<1x2048xf32>
    %cst = arith.constant 0.000000e+00 : f32
    %1 = vector.broadcast %cst : f32 to vector<1x2048xf32>
    %2 = arith.maximumf %0, %1 : vector<1x2048xf32>
    %c0_1 = arith.constant 0 : index
    %c0_2 = arith.constant 0 : index
    %3 = vector.load %arg2[%c0_1, %c0_2] : memref<1x2048xf32, #tpu.memory_space<vmem>>, vector<1x2048xf32>
    tpu.vector_store %arg2[%c0_1, %c0_2], %2 {strides = array<i32>} : memref<1x2048xf32, #tpu.memory_space<vmem>>, vector<1x2048xf32>,
    return
  }
  func.func @transform_0(%arg0: i32) -> (i32, i32) {
    %c0_i32 = arith.constant 0 : i32
    %c0_i32_0 = arith.constant 0 : i32
    return %arg0, %c0_i32 : i32, i32
  }
  func.func @transform_1(%arg0: i32) -> (i32, i32) {
    %c0_i32 = arith.constant 0 : i32
    %c0_i32_0 = arith.constant 0 : i32
    return %arg0, %c0_i32 : i32, i32
  }
}

</mosaic_0001>

<llo_original>
// kernel: tpu_custom_call.1
$region0: #{tpu_custom_call.1}
  #allocation0 [shape = 'u32[]', space=smem, size = 0x4, offset = 0x4, fixed_abs, tag = 'smem constant byte address 0x4 - core index']
  #allocation1 [shape = 'u32[144,128]{1,0:T(1,128)}', space=vmem, size = 0x12000, scoped, tag = 'internal scratch']
  %s0 = inlined_call_operand.hbm [shape: f32[1,2048], index: 0, kind: input, shape index: {}]
  %s1 = inlined_call_operand.hbm [shape: f32[1,2048], index: 1, kind: output, shape index: {}]
  %s2 = sld [smem:[#allocation0]]
  $region18: #{tpu_custom_call.1} parent=0
    _
  %s4 = ssub.s32 1, %s2
  %s5 = scalar_select 0, %s4, %s2
  $region1: #{tpu_custom_call.1} parent=0
    #allocation2 [shape = 'u8[8192]{0}', space=vmem, size = 0x2000, scoped, tag = 'input window, operand 0, single buffered']
    #allocation3 [shape = 's32[1]{0}', space=sflag, size = 0x4, scoped, tag = 'scoped memory for tpu_custom_call.1']
    #allocation4 [shape = 's32[1]{0}', space=sflag, size = 0x4, scoped, tag = 'scoped memory for tpu_custom_call.1']
    #allocation5 [shape = 'u8[8192]{0}', space=vmem, size = 0x2000, scoped, tag = 'output window, operand 0, single buffered']
    %6 = vsyncpa [#allocation3], 0
    %7 = vsyncpa [#allocation4], 0
    // Predicated region
    $region2: #{tpu_custom_call.1} parent=1 // pred_check
      _
    $region3: #{tpu_custom_call.1} parent=1 // pred_check_branch
      %9 = sbr.rel (0) target = $region5
    $region4: #{tpu_custom_call.1} parent=1 // pred_region
      %s11 = ssub.s32 256, 256
      %12 = vsyncadd [#allocation3], %s11
      %s14 = sshll.u32 [#allocation2], 4
      %s15 = int_to_ptr.vmem [resolvable:$true] %s14
      %17 = dma.hbm_to_vmem [thread:$0]  %s0, 256, %s15, [#allocation3]
    $region5: #{tpu_custom_call.1} parent=1 // pred_fallthru
      _
    // Predicated region
    $region6: #{tpu_custom_call.1} parent=1 // pred_check
      _
    $region7: #{tpu_custom_call.1} parent=1 // pred_check_branch
      %19 = sbr.rel (0) target = $region9
    $region8: #{tpu_custom_call.1} parent=1 // pred_region
      %20 = dma.done [#allocation3], 256
    $region9: #{tpu_custom_call.1} parent=1 // pred_fallthru
      _
    %v21 = vld [vmem:[#allocation2] sm:$0xff]
    %v22 = vld [vmem:[#allocation2 + $0x8] sm:$0xff]
    %v23 = vmax.f32 %v21, 0.0
    %v24 = vmax.f32 %v22, 0.0
    %25 = vst [vmem:[#allocation5] sm:$0xff] %v23
    %26 = vst [vmem:[#allocation5 + $0x8] sm:$0xff] %v24
    // Predicated region
    $region10: #{tpu_custom_call.1} parent=1 // pred_check
      _
    $region11: #{tpu_custom_call.1} parent=1 // pred_check_branch
      %28 = sbr.rel (0) target = $region13
    $region12: #{tpu_custom_call.1} parent=1 // pred_region
      %s30 = ssub.s32 256, 256
      %31 = vsyncadd [#allocation4], %s30
      %s33 = sshll.u32 [#allocation5], 4
      %s34 = int_to_ptr.vmem [resolvable:$true] %s33
      %36 = dma.vmem_to_hbm [thread:$0]  %s34, 256, %s1, [#allocation4]
    $region13: #{tpu_custom_call.1} parent=1 // pred_fallthru
      _
    // Predicated region
    $region14: #{tpu_custom_call.1} parent=1 // pred_check
      _
    $region15: #{tpu_custom_call.1} parent=1 // pred_check_branch
      %38 = sbr.rel (0) target = $region17
    $region16: #{tpu_custom_call.1} parent=1 // pred_region
      %39 = dma.done [#allocation4], 256
    $region17: #{tpu_custom_call.1} parent=1 // pred_fallthru
      _
    %40 = vsyncpa [#allocation3], 1
    %41 = vsyncpa [#allocation4], 1

</llo_original>
